<compile_context>
chip_gen: v7x
topology: tpu7x:2x2x1
jax: 0.10.0
libtpu: 0.0.40
codegen_flags: <defaults>
</compile_context>

<pallas_src>
import functools
import math

import jax
import jax.numpy as jnp
from jax.experimental import pallas as pl
from jax.experimental.pallas import tpu as pltpu

LANES = 128
DEFAULT_MAX_TILE_ROWS = 2048   # 2048 * 128 * 4B = 1 MiB per f32 input block (v5e/v6e)
V7X_MAX_TILE_ROWS = 8192       # 4 MiB per f32 input block (amortize step overhead at 3.2 TB/s)


def _dice_sums_kernel(x_ref, t_ref, out_ref, *, p_pow, rows, mask_tail):
    """Accumulate per-sample (intersection, union) lane-vectors into out_ref.

    x_ref/t_ref: (1, tile_rows, 128) logits / targets (any float dtype).
    out_ref:     (1, 2, 128) f32, resident across the tile axis (accumulator).
    """
    k = pl.program_id(1)                 # tile index within the sample
    tile_rows = x_ref.shape[1]

    @pl.when(k == 0)
    def _():
        out_ref[...] = jnp.zeros_like(out_ref)

    x = x_ref[0].astype(jnp.float32)     # (tile_rows, 128) logits
    t = t_ref[0].astype(jnp.float32)     # (tile_rows, 128) targets

    # sigmoid via tanh: a single EUP push per vreg instead of exp + reciprocal.
    pr = 0.5 * jnp.tanh(0.5 * x) + 0.5

    if mask_tail:
        # Last tile may read past the end of the sample (OOB rows are garbage):
        # zero both streams there.  Pure VPU iota/compare/select, hidden under DMA.
        row = jax.lax.broadcasted_iota(jnp.int32, (tile_rows, LANES), 0)
        valid = (row + k * tile_rows) < rows
        pr = jnp.where(valid, pr, 0.0)
        t = jnp.where(valid, t, 0.0)

    if p_pow == 2:
        pr = pr * pr
        t = t * t
    elif p_pow > 1:
        pr = jnp.power(pr, float(p_pow))
        t = jnp.power(t, float(p_pow))

    # In-tile reduction straight to one lane-vector per quantity: elementwise VALU
    # adds across vregs plus one cheap sublane (XLU) reduce per tile.
    inter_row = jnp.sum(pr * t, axis=0, keepdims=True)   # (1, 128)
    union_row = jnp.sum(pr + t, axis=0, keepdims=True)   # (1, 128)
    out_ref[0, pl.ds(0, 1), :] += inter_row
    out_ref[0, pl.ds(1, 1), :] += union_row


def _default_max_tile_rows():
    try:
        kind = jax.devices()[0].device_kind.lower()
    except Exception:
        return DEFAULT_MAX_TILE_ROWS
    if "v7" in kind or "7x" in kind:
        return V7X_MAX_TILE_ROWS
    return DEFAULT_MAX_TILE_ROWS


def _pick_tile(rows, max_tile_rows, row_align):
    """Pick (tile_rows, num_tiles): tile_rows * num_tiles >= rows, aligned sublanes."""
    if rows <= max_tile_rows:
        return rows, 1                           # whole sample in one block (full dim)
    ntiles = -(-rows // max_tile_rows)
    tile_rows = -(-rows // ntiles)
    tile_rows = -(-tile_rows // row_align) * row_align
    ntiles = -(-rows // tile_rows)
    return tile_rows, ntiles


def dice_loss(y_pred, y_true, *, smooth=1.0, p=1, reduction="mean",
              max_tile_rows=None):
    """Pallas TPU DiceLoss: 1 - (2*I + smooth)/(U + smooth), per-sample, then reduce."""
    if y_pred.ndim == 4 and y_pred.shape[1] == 1:
        y_pred = y_pred[:, 0]
    if y_true.ndim == 4 and y_true.shape[1] == 1:
        y_true = y_true[:, 0]
    assert y_pred.shape == y_true.shape, (y_pred.shape, y_true.shape)

    bsz = y_pred.shape[0]
    length = math.prod(y_pred.shape[1:])

    rows = -(-length // LANES)
    pad = rows * LANES - length

    x = y_pred.reshape(bsz, length)
    t = y_true.reshape(bsz, length)
    if pad:
        # Only the sub-128 tail of the flattened sample is zero-padded (needed for the
        # (rows, 128) view); its sigmoid(0)=0.5**p mass is subtracted exactly below.
        # TODO(synk): avoid this residual HBM copy for length % 128 != 0 by streaming
        # the flat (bsz, length) layout with an in-kernel lane mask.
        x = jnp.pad(x, ((0, 0), (0, pad)))
        t = jnp.pad(t, ((0, 0), (0, pad)))
    x = x.reshape(bsz, rows, LANES)
    t = t.reshape(bsz, rows, LANES)

    if max_tile_rows is None:
        max_tile_rows = _default_max_tile_rows()
    itemsize = max(1, min(x.dtype.itemsize, t.dtype.itemsize, 4))
    row_align = 8 * (4 // itemsize)              # 8 f32 / 16 bf16 / 32 int8 packed tiles
    tile_rows, ntiles = _pick_tile(rows, max_tile_rows, row_align)
    mask_tail = tile_rows * ntiles > rows        # last tile reads past the sample end

    kernel = functools.partial(_dice_sums_kernel, p_pow=int(p), rows=rows,
                               mask_tail=mask_tail)

    blk_bytes = tile_rows * LANES * (x.dtype.itemsize + t.dtype.itemsize)
    vmem_limit = int(min(max(4 * blk_bytes + (2 << 20), 16 << 20), 48 << 20))

    sums = pl.pallas_call(
        kernel,
        out_shape=jax.ShapeDtypeStruct((bsz, 2, LANES), jnp.float32),
        grid_spec=pltpu.PrefetchScalarGridSpec(
            num_scalar_prefetch=0,
            grid=(bsz, ntiles),
            in_specs=[pl.BlockSpec((1, tile_rows, LANES), lambda b, k: (b, k, 0)),
                      pl.BlockSpec((1, tile_rows, LANES), lambda b, k: (b, k, 0))],
            # Output blocked per sample -> batch axis can be sharded across the two
            # v7x TensorCores; the tile axis carries the accumulation ("arbitrary").
            out_specs=pl.BlockSpec((1, 2, LANES), lambda b, k: (b, 0, 0))),
        compiler_params=pltpu.CompilerParams(
            dimension_semantics=("parallel", "arbitrary"),
            vmem_limit_bytes=vmem_limit),
    )(x, t)

    intersection = jnp.sum(sums[:, 0, :], axis=-1)
    pad_val = (0.5 ** int(p)) if int(p) > 1 else 0.5
    union = jnp.sum(sums[:, 1, :], axis=-1) - pad_val * pad   # exact zero-pad correction
    dice_score = (2.0 * intersection + smooth) / (union + smooth)
    loss = 1.0 - dice_score

    if reduction == "mean":
        return loss.mean()
    if reduction == "sum":
        return loss.sum()
    if reduction == "none":
        return loss
    raise ValueError(f"Unexpected reduction method: {reduction}")


def _reference(y_pred, y_true, smooth=1.0, p=1, reduction="mean"):
    """Pure-JAX port of the PyTorch DiceLoss.forward spec."""
    yp = jax.nn.sigmoid(y_pred.astype(jnp.float32))
    yt = y_true.astype(jnp.float32)
    if yp.ndim == 4 and yp.shape[1] == 1:
        yp = yp[:, 0]
    if yt.ndim == 4 and yt.shape[1] == 1:
        yt = yt[:, 0]
    bs = yp.shape[0]
    yp = yp.reshape(bs, -1)
    yt = yt.reshape(bs, -1)
    if p > 1:
        yp = yp ** p
        yt = yt ** p
    inter = jnp.sum(yp * yt, axis=1)
    union = jnp.sum(yp, axis=1) + jnp.sum(yt, axis=1)
    score = (2.0 * inter + smooth) / (union + smooth)
    loss = 1.0 - score
    if reduction == "mean":
        return loss.mean()
    if reduction == "sum":
        return loss.sum()
    return loss


if __name__ == "__main__":
    key = jax.random.PRNGKey(0)
    k1, k2, k3, k4, k5, k6 = jax.random.split(key, 6)

    # Case 1: (B,1,H,W) logits, f32 {0,1} targets, defaults (smooth=1.0, p=1, mean).
    N, C, H, W = 2, 1, 16, 16
    y_pred = jax.random.normal(k1, (N, C, H, W), dtype=jnp.float32)
    y_true = (jax.random.uniform(k2, (N, H, W)) > 0.5).astype(jnp.float32)
    out1 = jax.block_until_ready(dice_loss(y_pred, y_true))
    ref1 = _reference(y_pred, y_true)
    assert jnp.allclose(out1, ref1, atol=1e-5, rtol=1e-5), (out1, ref1)

    # Case 2: 3-D inputs, bf16 targets (exact {0,1}), ragged tail -> zero-pad correction.
    H2, W2 = 13, 13
    y_pred2 = jax.random.normal(k3, (N, H2, W2), dtype=jnp.float32)
    y_true2 = (jax.random.uniform(k4, (N, H2, W2)) > 0.5).astype(jnp.float32)
    out2 = jax.block_until_ready(dice_loss(y_pred2, y_true2.astype(jnp.bfloat16)))
    ref2 = _reference(y_pred2, y_true2)
    assert jnp.allclose(out2, ref2, atol=1e-5, rtol=1e-5), (out2, ref2)

    # Case 2b: same ragged shape with p=2, reduction='sum' (checks the 0.25*pad correction).
    out2b = jax.block_until_ready(dice_loss(y_pred2, y_true2, p=2, reduction="sum"))
    ref2b = _reference(y_pred2, y_true2, p=2, reduction="sum")
    assert jnp.allclose(out2b, ref2b, atol=1e-5, rtol=1e-5), (out2b, ref2b)

    # Case 3: force the multi-tile + in-kernel tail-mask path (tiny max_tile_rows),
    # reduction='none'.
    H3, W3 = 48, 48
    y_pred3 = jax.random.normal(k5, (N, 1, H3, W3), dtype=jnp.float32)
    y_true3 = (jax.random.uniform(k6, (N, H3, W3)) > 0.5).astype(jnp.float32)
    out3 = jax.block_until_ready(
        dice_loss(y_pred3, y_true3, reduction="none", max_tile_rows=8))
    ref3 = _reference(y_pred3, y_true3, reduction="none")
    assert jnp.allclose(out3, ref3, atol=1e-5, rtol=1e-5), (out3, ref3)

    print("KERNEL_OK")
</pallas_src>

<mosaic_0001>
module attributes {stable_mosaic.version = 11 : i64} {
  func.func @_dice_sums_kernel(%arg0: i32, %arg1: i32, %arg2: memref<1x2x128xf32, #tpu.memory_space<vmem>>, %arg3: memref<1x2x128xf32, #tpu.memory_space<vmem>>, %arg4: memref<1x2x128xf32, #tpu.memory_space<vmem>>) attributes {dimension_semantics = [#tpu.dimension_semantics<parallel>, #tpu.dimension_semantics<arbitrary>], iteration_bounds = array<i64: 2, 1>, scalar_prefetch = 0 : i64, scratch_operands = 0 : i64, tpu.core_type = #tpu.core_type<tc>, window_params = [{transform_indices = @transform_0, window_bounds = array<i64: 1, 2, 128>}, {transform_indices = @transform_1, window_bounds = array<i64: 1, 2, 128>}, {transform_indices = @transform_2, window_bounds = array<i64: 1, 2, 128>}]} {
    %c0_i32 = arith.constant 0 : i32
    %0 = arith.cmpi eq, %arg1, %c0_i32 : i32
    %1 = arith.extui %0 : i1 to i32
    %c0_i32_0 = arith.constant 0 : i32
    %2 = arith.cmpi ne, %1, %c0_i32_0 : i32
    scf.if %2 {
      %cst_21 = arith.constant 0.000000e+00 : f32
      %32 = vector.broadcast %cst_21 : f32 to vector<1x2x128xf32>
      %c0_22 = arith.constant 0 : index
      %c0_23 = arith.constant 0 : index
      %c0_24 = arith.constant 0 : index
      %33 = vector.load %arg4[%c0_22, %c0_23, %c0_24] : memref<1x2x128xf32, #tpu.memory_space<vmem>>, vector<1x2x128xf32>
      tpu.vector_store %arg4[%c0_22, %c0_23, %c0_24], %32 {strides = array<i32>} : memref<1x2x128xf32, #tpu.memory_space<vmem>>, vector<1x2x128xf32>,
    } else {
    }
    %c0 = arith.constant 0 : index
    %c0_1 = arith.constant 0 : index
    %c0_2 = arith.constant 0 : index
    %3 = vector.load %arg2[%c0, %c0_1, %c0_2] : memref<1x2x128xf32, #tpu.memory_space<vmem>>, vector<1x2x128xf32>
    %4 = vector.shape_cast %3 : vector<1x2x128xf32> to vector<2x128xf32>
    %c0_3 = arith.constant 0 : index
    %c0_4 = arith.constant 0 : index
    %c0_5 = arith.constant 0 : index
    %5 = vector.load %arg3[%c0_3, %c0_4, %c0_5] : memref<1x2x128xf32, #tpu.memory_space<vmem>>, vector<1x2x128xf32>
    %6 = vector.shape_cast %5 : vector<1x2x128xf32> to vector<2x128xf32>
    %cst = arith.constant 5.000000e-01 : f32
    %7 = vector.broadcast %cst : f32 to vector<2x128xf32>
    %8 = arith.mulf %7, %4 : vector<2x128xf32>
    %9 = math.tanh %8 : vector<2x128xf32>
    %cst_6 = arith.constant 5.000000e-01 : f32
    %10 = vector.broadcast %cst_6 : f32 to vector<2x128xf32>
    %11 = arith.mulf %10, %9 : vector<2x128xf32>
    %cst_7 = arith.constant 5.000000e-01 : f32
    %12 = vector.broadcast %cst_7 : f32 to vector<2x128xf32>
    %13 = arith.addf %11, %12 : vector<2x128xf32>
    %14 = arith.mulf %13, %6 : vector<2x128xf32>
    %cst_8 = arith.constant dense<0.000000e+00> : vector<128xf32>
    %15 = vector.multi_reduction <add>, %14, %cst_8 [0] : vector<2x128xf32> to vector<128xf32>
    %16 = vector.shape_cast %15 : vector<128xf32> to vector<1x128xf32>
    %17 = arith.addf %13, %6 : vector<2x128xf32>
    %cst_9 = arith.constant dense<0.000000e+00> : vector<128xf32>
    %18 = vector.multi_reduction <add>, %17, %cst_9 [0] : vector<2x128xf32> to vector<128xf32>
    %19 = vector.shape_cast %18 : vector<128xf32> to vector<1x128xf32>
    %c0_10 = arith.constant 0 : index
    %c0_11 = arith.constant 0 : index
    %c0_12 = arith.constant 0 : index
    %20 = vector.load %arg4[%c0_10, %c0_11, %c0_12] : memref<1x2x128xf32, #tpu.memory_space<vmem>>, vector<1x1x128xf32>
    %21 = vector.shape_cast %20 : vector<1x1x128xf32> to vector<1x128xf32>
    %22 = arith.addf %21, %16 : vector<1x128xf32>
    %c0_13 = arith.constant 0 : index
    %c0_14 = arith.constant 0 : index
    %c0_15 = arith.constant 0 : index
    %23 = vector.load %arg4[%c0_13, %c0_14, %c0_15] : memref<1x2x128xf32, #tpu.memory_space<vmem>>, vector<1x1x128xf32>
    %24 = vector.shape_cast %23 : vector<1x1x128xf32> to vector<1x128xf32>
    %25 = vector.shape_cast %22 : vector<1x128xf32> to vector<1x1x128xf32>
    tpu.vector_store %arg4[%c0_13, %c0_14, %c0_15], %25 {strides = array<i32>} : memref<1x2x128xf32, #tpu.memory_space<vmem>>, vector<1x1x128xf32>,
    %c0_16 = arith.constant 0 : index
    %c1 = arith.constant 1 : index
    %c0_17 = arith.constant 0 : index
    %26 = vector.load %arg4[%c0_16, %c1, %c0_17] : memref<1x2x128xf32, #tpu.memory_space<vmem>>, vector<1x1x128xf32>
    %27 = vector.shape_cast %26 : vector<1x1x128xf32> to vector<1x128xf32>
    %28 = arith.addf %27, %19 : vector<1x128xf32>
    %c0_18 = arith.constant 0 : index
    %c1_19 = arith.constant 1 : index
    %c0_20 = arith.constant 0 : index
    %29 = vector.load %arg4[%c0_18, %c1_19, %c0_20] : memref<1x2x128xf32, #tpu.memory_space<vmem>>, vector<1x1x128xf32>
    %30 = vector.shape_cast %29 : vector<1x1x128xf32> to vector<1x128xf32>
    %31 = vector.shape_cast %28 : vector<1x128xf32> to vector<1x1x128xf32>
    tpu.vector_store %arg4[%c0_18, %c1_19, %c0_20], %31 {strides = array<i32>} : memref<1x2x128xf32, #tpu.memory_space<vmem>>, vector<1x1x128xf32>,
    return
  }
  func.func @transform_0(%arg0: i32, %arg1: i32) -> (i32, i32, i32) {
    %c0_i32 = arith.constant 0 : i32
    %c0_i32_0 = arith.constant 0 : i32
    return %arg0, %arg1, %c0_i32 : i32, i32, i32
  }
  func.func @transform_1(%arg0: i32, %arg1: i32) -> (i32, i32, i32) {
    %c0_i32 = arith.constant 0 : i32
    %c0_i32_0 = arith.constant 0 : i32
    return %arg0, %arg1, %c0_i32 : i32, i32, i32
  }
  func.func @transform_2(%arg0: i32, %arg1: i32) -> (i32, i32, i32) {
    %c0_i32 = arith.constant 0 : i32
    %c0_i32_0 = arith.constant 0 : i32
    %c0_i32_1 = arith.constant 0 : i32
    return %arg0, %c0_i32, %c0_i32_0 : i32, i32, i32
  }
}

</mosaic_0001>

<llo_original>
// kernel: tpu_custom_call.1
$region0: #{tpu_custom_call.1}
  #allocation0 [shape = 'u32[]', space=smem, size = 0x4, offset = 0x4, fixed_abs, tag = 'smem constant byte address 0x4 - core index']
  #allocation1 [shape = 'u32[144,128]{1,0:T(1,128)}', space=vmem, size = 0x12000, scoped, tag = 'internal scratch']
  %s0 = inlined_call_operand.hbm [shape: f32[2,2,128], index: 0, kind: input, shape index: {}]
  %s1 = inlined_call_operand.hbm [shape: f32[2,2,128], index: 1, kind: input, shape index: {}]
  %s2 = inlined_call_operand.hbm [shape: f32[2,2,128], index: 2, kind: output, shape index: {}]
  %s3 = sld [smem:[#allocation0]]
  $region53: #{tpu_custom_call.1} parent=0
    _
  %s5 = ssub.s32 1, %s3
  %s6 = scalar_select 0, %s5, %s3
  $region1: #{tpu_custom_call.1} parent=0
    #allocation2 [shape = 'u8[2048]{0}', space=vmem, size = 0x800, scoped, tag = 'input window, operand 0']
    #allocation3 [shape = 's32[2]{0}', space=sflag, size = 0x8, scoped, tag = 'scoped memory for tpu_custom_call.1']
    #allocation4 [shape = 's32[2]{0}', space=sflag, size = 0x8, scoped, tag = 'scoped memory for tpu_custom_call.1']
    #allocation5 [shape = 'u8[2048]{0}', space=vmem, size = 0x800, scoped, tag = 'input window, operand 1']
    #allocation6 [shape = 's32[2]{0}', space=sflag, size = 0x8, scoped, tag = 'scoped memory for tpu_custom_call.1']
    #allocation7 [shape = 'u8[2048]{0}', space=vmem, size = 0x800, scoped, tag = 'output window, operand 0']
    %7 = vsyncpa [#allocation3], 0
    %s8 = scalar_lea.sflag [#allocation3], 1
    %9 = vsyncpa %s8, 0
    %10 = vsyncpa [#allocation6], 0
    %s11 = scalar_lea.sflag [#allocation6], 1
    %12 = vsyncpa %s11, 0
    %13 = vsyncpa [#allocation4], 0
    %s14 = scalar_lea.sflag [#allocation4], 1
    %15 = vsyncpa %s14, 0
    loop: start=0, step=1, limit=4
    $region2: #{tpu_custom_call.1} parent=1 // loop_pre_header
      _
    $region3: #{tpu_custom_call.1} parent=1 // loop_header
      %s17 = sphi 0, %s21
      %p18 = scmp.ge.s32.totalorder %s17, 4
      %s24 = sphi 0, %s36
      %s25 = sphi 0, %s32
      %s26 = sphi 0, %s24
      %s27 = sphi 0, %s25
      %s28 = sphi 0, %s26
      %s29 = sphi 0, %s27
      %s41 = sphi 0, %s43
      %s44 = sphi 0, %s41
      %s45 = sphi 0, %s44
      %s61 = sphi 0, %s45
      %s69 = sphi 0, %s71
      %s72 = sphi 0, %s69
      %s73 = sphi 0, %s72
      %s89 = sphi 0, %s73
      %s95 = sphi 0, %s97
      %s98 = sphi 0, %s95
      %s99 = sphi 0, %s98
      %s115 = sphi 0, %s99
    $region4: #{tpu_custom_call.1} parent=1 // loop_header_branch
      %20 = sbr.rel (%p18) target = $region8
    $region5: #{tpu_custom_call.1} parent=1 // loop_body
      %s22 = ssub.s32 %s17, 1
      %s23 = ssub.s32 %s17, 2
      %s30 = sadd.s32 1, %s25
      %p31 = scmp.ge.s32.totalorder %s30, 1
      %s32 = scalar_select %p31, 0, %s30
      %s33 = sadd.s32 1, %s24
      %s34 = scalar_select %p31, %s33, %s24
      %p35 = scmp.ge.s32.totalorder %s34, 2
      %s36 = scalar_select %p35, 0, %s34
      %s37 = ssub.s32 %s24, %s36
      %s38 = ssub.s32 %s25, %s32
      %s39 = sor.u32 %s37, %s38
      %p40 = scmp.eq.s32.totalorder %s39, 0
      %s42 = sadd.s32 %s41, 1
      %s43 = scalar_select %p40, %s41, %s42
      %p46 = pneg %p40
      %p47 = scmp.eq.s32.totalorder %s17, 1
      %p48 = por %p46, %p47
      %p49 = scmp.ne.s32.totalorder %s41, %s44
      %p50 = scmp.eq.s32.totalorder %s17, 0
      %p51 = por %p49, %p50
      %p52 = scmp.ne.s32.totalorder %s41, %s44
      %p53 = scmp.eq.s32.totalorder %s22, 1
      %p54 = por %p52, %p53
      %p55 = scmp.ne.s32.totalorder %s44, %s45
      %p56 = scmp.eq.s32.totalorder %s22, 0
      %p57 = por %p55, %p56
      %p58 = scmp.ne.s32.totalorder %s44, %s45
      %p59 = scmp.eq.s32.totalorder %s23, 1
      %p60 = por %p58, %p59
      %p62 = scmp.ne.s32.totalorder %s45, %s61
      %p63 = scmp.eq.s32.totalorder %s23, 0
      %p64 = por %p62, %p63
      %s65 = ssub.s32 %s24, %s36
      %s66 = ssub.s32 %s25, %s32
      %s67 = sor.u32 %s65, %s66
      %p68 = scmp.eq.s32.totalorder %s67, 0
      %s70 = sadd.s32 %s69, 1
      %s71 = scalar_select %p68, %s69, %s70
      %p74 = pneg %p68
      %p75 = scmp.eq.s32.totalorder %s17, 1
      %p76 = por %p74, %p75
      %p77 = scmp.ne.s32.totalorder %s69, %s72
      %p78 = scmp.eq.s32.totalorder %s17, 0
      %p79 = por %p77, %p78
      %p80 = scmp.ne.s32.totalorder %s69, %s72
      %p81 = scmp.eq.s32.totalorder %s22, 1
      %p82 = por %p80, %p81
      %p83 = scmp.ne.s32.totalorder %s72, %s73
      %p84 = scmp.eq.s32.totalorder %s22, 0
      %p85 = por %p83, %p84
      %p86 = scmp.ne.s32.totalorder %s72, %s73
      %p87 = scmp.eq.s32.totalorder %s23, 1
      %p88 = por %p86, %p87
      %p90 = scmp.ne.s32.totalorder %s73, %s89
      %p91 = scmp.eq.s32.totalorder %s23, 0
      %p92 = por %p90, %p91
      %s93 = ssub.s32 %s24, %s36
      %p94 = scmp.eq.s32.totalorder %s93, 0
      %s96 = sadd.s32 %s95, 1
      %s97 = scalar_select %p94, %s95, %s96
      %p100 = pneg %p94
      %p101 = scmp.eq.s32.totalorder %s17, 1
      %p102 = por %p100, %p101
      %p103 = scmp.ne.s32.totalorder %s95, %s98
      %p104 = scmp.eq.s32.totalorder %s17, 0
      %p105 = por %p103, %p104
      %p106 = scmp.ne.s32.totalorder %s95, %s98
      %p107 = scmp.eq.s32.totalorder %s22, 1
      %p108 = por %p106, %p107
      %p109 = scmp.ne.s32.totalorder %s98, %s99
      %p110 = scmp.eq.s32.totalorder %s22, 0
      %p111 = por %p109, %p110
      %p112 = scmp.ne.s32.totalorder %s98, %s99
      %p113 = scmp.eq.s32.totalorder %s23, 1
      %p114 = por %p112, %p113
      %p116 = scmp.ne.s32.totalorder %s99, %s115
      %p117 = scmp.eq.s32.totalorder %s23, 0
      %p118 = por %p116, %p117
      %p119 = scmp.le.s32.totalorder 1, %s17
      %p120 = scmp.lt.s32.totalorder %s17, 3
      %p121 = pnand %p119, %p120
      %p122 = pneg %p121
      // Predicated region
      $region9: #{tpu_custom_call.1} parent=5 // pred_check
        _
      $region10: #{tpu_custom_call.1} parent=5 // pred_check_branch
        %124 = sbr.rel (%p121) target = $region12
      $region11: #{tpu_custom_call.1} parent=5 // pred_region
        %s125 = ssub.s32 %s17, 1
      $region12: #{tpu_custom_call.1} parent=5 // pred_fallthru
        _
      %p126 = scmp.lt.s32.totalorder %s17, 2
      // Predicated region
      $region13: #{tpu_custom_call.1} parent=5 // pred_check
        %p127 = pneg %p126
      $region14: #{tpu_custom_call.1} parent=5 // pred_check_branch
        %129 = sbr.rel (%p127) target = $region16
      $region15: #{tpu_custom_call.1} parent=5 // pred_region
        // Predicated region
        $region17: #{tpu_custom_call.1} parent=15 // pred_check
          %p130 = pneg %p51
        $region18: #{tpu_custom_call.1} parent=15 // pred_check_branch
          %132 = sbr.rel (%p130) target = $region20
        $region19: #{tpu_custom_call.1} parent=15 // pred_region
          %s133 = sand.u32 %s41, 1
          %s134 = scalar_lea.sflag [#allocation3], %s133
          %s135 = sand.u32 %s41, 1
          %s136 = smul.addr %s135, 2
          %s137 = scalar_lea.vmem [#allocation2], %s136
          %s139 = ssub.s32 32, 32
          %140 = vsyncadd %s134, %s139
          %s141 = sadd.s32 %s25, %s24
          %s142 = smul.addr %s141, 32
          %s143 = scalar_lea.hbm %s0, %s142
          %s145 = sshll.u32 %s137, 4
          %s146 = int_to_ptr.vmem [resolvable:$true] %s145
          %148 = dma.hbm_to_vmem [thread:$0]  %s143, 32, %s146, %s134
        $region20: #{tpu_custom_call.1} parent=15 // pred_fallthru
          _
        // Predicated region
        $region21: #{tpu_custom_call.1} parent=15 // pred_check
          %p149 = pneg %p79
        $region22: #{tpu_custom_call.1} parent=15 // pred_check_branch
          %151 = sbr.rel (%p149) target = $region24
        $region23: #{tpu_custom_call.1} parent=15 // pred_region
          %s152 = sand.u32 %s69, 1
          %s153 = scalar_lea.sflag [#allocation6], %s152
          %s154 = sand.u32 %s69, 1
          %s155 = smul.addr %s154, 2
          %s156 = scalar_lea.vmem [#allocation5], %s155
          %s158 = ssub.s32 32, 32
          %159 = vsyncadd %s153, %s158
          %s160 = sadd.s32 %s25, %s24
          %s161 = smul.addr %s160, 32
          %s162 = scalar_lea.hbm %s1, %s161
          %s164 = sshll.u32 %s156, 4
          %s165 = int_to_ptr.vmem [resolvable:$true] %s164
          %167 = dma.hbm_to_vmem [thread:$0]  %s162, 32, %s165, %s153
        $region24: #{tpu_custom_call.1} parent=15 // pred_fallthru
          _
      $region16: #{tpu_custom_call.1} parent=5 // pred_fallthru
        _
      %p168 = scmp.le.s32.totalorder 1, %s17
      %p169 = scmp.lt.s32.totalorder %s17, 3
      %p170 = pnand %p168, %p169
      %p171 = pneg %p170
      // Predicated region
      $region25: #{tpu_custom_call.1} parent=5 // pred_check
        _
      $region26: #{tpu_custom_call.1} parent=5 // pred_check_branch
        %173 = sbr.rel (%p170) target = $region28
      $region27: #{tpu_custom_call.1} parent=5 // pred_region
        %s174 = ssub.s32 %s17, 1
        %s175 = sand.u32 %s44, 1
        %s176 = scalar_lea.sflag [#allocation3], %s175
        %s177 = sand.u32 %s44, 1
        %s178 = smul.addr %s177, 2
        %s179 = scalar_lea.vmem [#allocation2], %s178
        // Predicated region
        $region29: #{tpu_custom_call.1} parent=27 // pred_check
          %p180 = pneg %p57
        $region30: #{tpu_custom_call.1} parent=27 // pred_check_branch
          %182 = sbr.rel (%p180) target = $region32
        $region31: #{tpu_custom_call.1} parent=27 // pred_region
          %183 = dma.done %s176, 32
        $region32: #{tpu_custom_call.1} parent=27 // pred_fallthru
          _
        %s184 = sand.u32 %s72, 1
        %s185 = scalar_lea.sflag [#allocation6], %s184
        %s186 = sand.u32 %s72, 1
        %s187 = smul.addr %s186, 2
        %s188 = scalar_lea.vmem [#allocation5], %s187
        // Predicated region
        $region33: #{tpu_custom_call.1} parent=27 // pred_check
          %p189 = pneg %p85
        $region34: #{tpu_custom_call.1} parent=27 // pred_check_branch
          %191 = sbr.rel (%p189) target = $region36
        $region35: #{tpu_custom_call.1} parent=27 // pred_region
          %192 = dma.done %s185, 32
        $region36: #{tpu_custom_call.1} parent=27 // pred_fallthru
          _
        %s193 = sand.u32 %s44, 1
        %s194 = scalar_lea.sflag [#allocation3], %s193
        %s195 = sand.u32 %s44, 1
        %s196 = smul.addr %s195, 2
        %s197 = scalar_lea.vmem [#allocation2], %s196
        %p198 = pneg %p57
        %p199 = pneg %p54
        %s200 = sand.u32 %s72, 1
        %s201 = scalar_lea.sflag [#allocation6], %s200
        %s202 = sand.u32 %s72, 1
        %s203 = smul.addr %s202, 2
        %s204 = scalar_lea.vmem [#allocation5], %s203
        %p205 = pneg %p85
        %p206 = pneg %p82
        %p207 = pneg %p111
        %p208 = pneg %p108
        %s209 = sand.u32 %s98, 1
        %s210 = scalar_lea.sflag [#allocation4], %s209
        %s211 = sand.u32 %s98, 1
        %s212 = smul.addr %s211, 2
        %s213 = scalar_lea.vmem [#allocation7], %s212
        %p214 = scmp.eq.s32.totalorder %s27, 0
        // Predicated region
        $region37: #{tpu_custom_call.1} parent=27 // pred_check
          %p215 = pneg %p214
        $region38: #{tpu_custom_call.1} parent=27 // pred_check_branch
          %217 = sbr.rel (%p215) target = $region40
        $region39: #{tpu_custom_call.1} parent=27 // pred_region
          %218 = vst [vmem:[%s213] sm:$0x3] 0.0
        $region40: #{tpu_custom_call.1} parent=27 // pred_fallthru
          _
        %v219 = vld [vmem:[%s179] sm:$0x3]
        %v220 = vld [vmem:[%s188] sm:$0x3]
        %v221 = vmul.f32 %v219, 0.5
        %v222 = vtanh.pop %v221
        %v223 = vmul.f32 %v222, 0.5
        %v224 = vadd.f32 %v223, 0.5
        %v225 = vmul.f32 %v224, %v220
        %vm226 = vcmask 1041408
        %v227 = vsel %vm226, %v225, 0.0
        %v228 = vrot.slane %v227, 4
        %v229 = vadd.f32 %v227, %v228
        %v230 = vrot.slane %v229, 2
        %v231 = vadd.f32 %v229, %v230
        %v232 = vrot.slane %v231, 1
        %v233 = vadd.f32 %v231, %v232
        %v234 = vadd.f32 %v224, %v220
        %v235 = vsel %vm226, %v234, 0.0
        %v236 = vrot.slane %v235, 4
        %v237 = vadd.f32 %v235, %v236
        %v238 = vrot.slane %v237, 2
        %v239 = vadd.f32 %v237, %v238
        %v240 = vrot.slane %v239, 1
        %v241 = vadd.f32 %v239, %v240
        %v242 = vld [vmem:[%s213] sm:$0x1]
        %v243 = vadd.f32 %v242, %v233
        %244 = vst [vmem:[%s213] sm:$0x1] %v243
        %v245 = vld [vmem:[%s213 + $0x1] sm:$0x1]
        %v246 = vadd.f32 %v245, %v241
        %247 = vst [vmem:[%s213 + $0x1] sm:$0x1] %v246
        %s248 = sand.u32 %s98, 1
        %s249 = scalar_lea.sflag [#allocation4], %s248
        %s250 = sand.u32 %s98, 1
        %s251 = smul.addr %s250, 2
        %s252 = scalar_lea.vmem [#allocation7], %s251
        // Predicated region
        $region41: #{tpu_custom_call.1} parent=27 // pred_check
          %p253 = pneg %p108
        $region42: #{tpu_custom_call.1} parent=27 // pred_check_branch
          %255 = sbr.rel (%p253) target = $region44
        $region43: #{tpu_custom_call.1} parent=27 // pred_region
          %s257 = ssub.s32 32, 32
          %258 = vsyncadd %s249, %s257
          %s259 = smul.addr %s26, 32
          %s260 = scalar_lea.hbm %s2, %s259
          %s262 = sshll.u32 %s252, 4
          %s263 = int_to_ptr.vmem [resolvable:$true] %s262
          %265 = dma.vmem_to_hbm [thread:$0]  %s263, 32, %s260, %s249
        $region44: #{tpu_custom_call.1} parent=27 // pred_fallthru
          _
      $region28: #{tpu_custom_call.1} parent=5 // pred_fallthru
        _
      %p266 = scmp.le.s32.totalorder 2, %s17
      // Predicated region
      $region45: #{tpu_custom_call.1} parent=5 // pred_check
        %p267 = pneg %p266
      $region46: #{tpu_custom_call.1} parent=5 // pred_check_branch
        %269 = sbr.rel (%p267) target = $region48
      $region47: #{tpu_custom_call.1} parent=5 // pred_region
        %s270 = ssub.s32 %s17, 2
        // Predicated region
        $region49: #{tpu_custom_call.1} parent=47 // pred_check
          %p271 = pneg %p114
        $region50: #{tpu_custom_call.1} parent=47 // pred_check_branch
          %273 = sbr.rel (%p271) target = $region52
        $region51: #{tpu_custom_call.1} parent=47 // pred_region
          %s274 = sand.u32 %s99, 1
          %s275 = scalar_lea.sflag [#allocation4], %s274
          %s276 = sand.u32 %s99, 1
          %s277 = smul.addr %s276, 2
          %s278 = scalar_lea.vmem [#allocation7], %s277
          %279 = dma.done %s275, 32
        $region52: #{tpu_custom_call.1} parent=47 // pred_fallthru
          _
      $region48: #{tpu_custom_call.1} parent=5 // pred_fallthru
        _
    $region6: #{tpu_custom_call.1} parent=1 // loop_footer
      %s21 = sadd.s32 1, %s17
    $region7: #{tpu_custom_call.1} parent=1 // loop_footer_branch
      %16 = sbr.rel target = $region3
    $region8: #{tpu_custom_call.1} parent=1 // loop_exit
      _
    %280 = vsyncpa [#allocation3], 1
    %s281 = scalar_lea.sflag [#allocation3], 1
    %282 = vsyncpa %s281, 1
    %283 = vsyncpa [#allocation6], 1
    %s284 = scalar_lea.sflag [#allocation6], 1
    %285 = vsyncpa %s284, 1
    %286 = vsyncpa [#allocation4], 1
    %s287 = scalar_lea.sflag [#allocation4], 1
    %288 = vsyncpa %s287, 1

</llo_original>
